<compile_context>
chip_gen: v7x
topology: tpu7x:2x2x1
jax: 0.10.0
libtpu: 0.0.40
codegen_flags: <defaults>
</compile_context>

<pallas_src>
import functools

import jax
import jax.numpy as jnp
import numpy as np
from jax import lax
from jax.experimental import pallas as pl
from jax.experimental.pallas import tpu as pltpu

_F32 = np.dtype(jnp.float32)


def _round_up(x, m):
    return (x + m - 1) // m * m


def _exp(x, exp_dtype):
    # bf16 exp roughly doubles EUP throughput on v6e/v7x; keep max/sum in f32.
    if exp_dtype == _F32:
        return jnp.exp(x)
    return jnp.exp(x.astype(exp_dtype))


# ----------------------------------------------------------------------------- #
# Single-pass kernel: full context tile resident, plain softmax.                 #
# ----------------------------------------------------------------------------- #
def _attn_kernel_single(q_ref, c_ref, win_ref, wom_ref, woq_ref, out_ref, wts_ref,
                        *, exp_dtype, approx_recip):
    cdt = q_ref.dtype
    q = q_ref[...]
    c = c_ref[...]

    # linear_in ("general" attention): transform the query on the MXU.
    qg = jnp.dot(q, win_ref[...], preferred_element_type=jnp.float32)
    qg_c = qg.astype(cdt)

    # scores = qg @ context^T via an NT dot_general (contract the feature axes);
    # no in-kernel transpose of the context tile.
    s = lax.dot_general(qg_c, c, dimension_numbers=(((1,), (1,)), ((), ())),
                        preferred_element_type=jnp.float32)

    # softmax over the context axis.  Without a context mask the denominator is
    # >= 1, so torch's nan_to_num is a no-op and is omitted.
    m = jnp.max(s, axis=-1, keepdims=True)
    p = _exp(s - m, exp_dtype)
    denom = jnp.sum(p, axis=-1, keepdims=True, dtype=jnp.float32)
    w = p * pl.reciprocal(denom, approx=approx_recip)          # EUP reciprocal

    # mix = weights @ context (MXU)
    mix = jnp.dot(w.astype(cdt), c, preferred_element_type=jnp.float32)

    # linear_out on concat(mix, qg) == mix @ Wo_mix + qg @ Wo_q, then tanh.
    out = jnp.tanh(
        jnp.dot(mix.astype(cdt), wom_ref[...], preferred_element_type=jnp.float32)
        + jnp.dot(qg_c, woq_ref[...], preferred_element_type=jnp.float32))

    out_ref[...] = out.astype(out_ref.dtype)
    wts_ref[...] = w.astype(wts_ref.dtype)


# ----------------------------------------------------------------------------- #
# KV-tiled two-phase online-softmax kernel.                                      #
#   grid axis 2 has length 2 * k_tiles:                                          #
#     k in [0, k_tiles)           -> phase 1: running max/sum + mix accumulation #
#     k == k_tiles - 1 (end of 1) -> finalize attended output, cache 1/l         #
#     k in [k_tiles, 2*k_tiles)   -> phase 2: recompute scores per KV tile and   #
#                                    emit the normalized weights tile            #
# ----------------------------------------------------------------------------- #
def _attn_kernel_tiled(q_ref, c_ref, win_ref, wom_ref, woq_ref, out_ref, wts_ref,
                       qg_sc, m_sc, l_sc, acc_sc,
                       *, k_tiles, kv_tile, valid_ql, exp_dtype, approx_recip):
    cdt = q_ref.dtype
    k = pl.program_id(2)
    k_mod = k % k_tiles                       # KV-tile index in both phases

    @pl.when(k == 0)
    def _():
        # linear_in once per (batch, OL-tile); reused by every KV step of both phases.
        qg = jnp.dot(q_ref[...], win_ref[...], preferred_element_type=jnp.float32)
        qg_sc[...] = qg.astype(qg_sc.dtype)
        m_sc[...] = jnp.full(m_sc.shape, -jnp.inf, dtype=m_sc.dtype)
        l_sc[...] = jnp.zeros(l_sc.shape, dtype=l_sc.dtype)
        acc_sc[...] = jnp.zeros(acc_sc.shape, dtype=acc_sc.dtype)

    def _scores(c):
        s = lax.dot_general(qg_sc[...], c, dimension_numbers=(((1,), (1,)), ((), ())),
                            preferred_element_type=jnp.float32)
        if valid_ql is not None:
            # mask zero-padded context columns (padding only exists on the last tile)
            col = lax.broadcasted_iota(jnp.int32, s.shape, 1) + k_mod * kv_tile
            s = jnp.where(col < valid_ql, s, jnp.float32(-1e30))
        return s

    # ---- phase 1: streaming softmax statistics + unnormalized mix accumulation
    @pl.when(k < k_tiles)
    def _():
        c = c_ref[...]
        s = _scores(c)
        m_prev = m_sc[...]
        m_new = jnp.maximum(m_prev, jnp.max(s, axis=-1, keepdims=True))
        alpha = jnp.exp(m_prev - m_new)
        p = _exp(s - m_new, exp_dtype)
        l_sc[...] = alpha * l_sc[...] + jnp.sum(p, axis=-1, keepdims=True,
                                                dtype=jnp.float32)
        acc_sc[...] = alpha * acc_sc[...] + jnp.dot(
            p.astype(cdt), c, preferred_element_type=jnp.float32)
        m_sc[...] = m_new

    # ---- end of phase 1: finalize the attended output; cache 1/l for phase 2
    @pl.when(k == k_tiles - 1)
    def _():
        inv_l = pl.reciprocal(l_sc[...], approx=approx_recip)
        mix = acc_sc[...] * inv_l
        out = jnp.tanh(
            jnp.dot(mix.astype(cdt), wom_ref[...], preferred_element_type=jnp.float32)
            + jnp.dot(qg_sc[...], woq_ref[...], preferred_element_type=jnp.float32))
        out_ref[...] = out.astype(out_ref.dtype)
        l_sc[...] = inv_l

    # ---- phase 2: recompute scores per KV tile and emit normalized weights
    @pl.when(k >= k_tiles)
    def _():
        s = _scores(c_ref[...])
        w = _exp(s - m_sc[...], exp_dtype) * l_sc[...]        # l_sc holds 1/l here
        wts_ref[...] = w.astype(wts_ref.dtype)


# ----------------------------------------------------------------------------- #
# Wrapper                                                                        #
# ----------------------------------------------------------------------------- #
def attention_general(query, context, w_in, w_out, *,
                      matmul_dtype=None, weights_dtype=None, exp_dtype=None,
                      kv_tile=None):
    """General ("W_a") attention forward.

    query: (B, OL, D)  context: (B, QL, D)
    w_in:  (D, D)      w_out:   (D, 2D)   -- nn.Linear weights (y = x @ W^T)
    returns (output (B, OL, D), weights (B, OL, QL))

    matmul_dtype:  MXU operand dtype (bf16 is full-rate on v5e/v6e/v7x; accumulation
                   and softmax stay f32).
    weights_dtype: storage dtype of the attention-weights output (bf16 halves the
                   dominant HBM writeback; default = query dtype).
    exp_dtype:     dtype of the big softmax exp (bf16 halves EUP pressure on
                   v6e/v7x; leave f32 on v5e).
    kv_tile:       optional cap on context rows processed per grid step; values
                   smaller than QL force the KV-tiled online-softmax path.
    """
    B, OL, D = query.shape
    Bc, QL, Dc = context.shape
    assert (Bc, Dc) == (B, D), "query/context batch or feature dims mismatch"
    assert w_in.shape == (D, D) and w_out.shape == (D, 2 * D)

    out_dtype = jnp.dtype(query.dtype)
    wts_dtype = jnp.dtype(weights_dtype) if weights_dtype is not None else out_dtype
    cdt = jnp.dtype(matmul_dtype) if matmul_dtype is not None else out_dtype
    edt = jnp.dtype(exp_dtype) if exp_dtype is not None else _F32
    approx_recip = cdt == jnp.dtype(jnp.bfloat16)

    # ---- per-generation VMEM budget (v5e default scoped limit is only 16 MiB;
    #      v7x has 64 MiB physical) -------------------------------------------
    try:
        vmem_cap = int(pltpu.get_tpu_info().vmem_capacity_bytes)
    except Exception:
        vmem_cap = 64 << 20                       # v7x-safe fallback
    vmem_limit = max(32 << 20, min(vmem_cap * 3 // 4, 96 << 20))
    tile_budget = vmem_limit - (6 << 20)          # headroom for Mosaic internals

    cs, osz, wsz = cdt.itemsize, out_dtype.itemsize, wts_dtype.itemsize

    def _footprint(olt, qlt):
        f = 2 * olt * D * cs            # query block (double-buffered)
        f += 2 * qlt * D * cs           # context block (double-buffered)
        f += 3 * D * D * cs             # invariant weight blocks (single-buffered)
        f += 2 * olt * D * osz          # output block
        f += 2 * olt * qlt * wsz        # weights block
        f += olt * D * (cs + 4)         # qg / acc scratch
        f += 4 * olt * qlt * 4          # live f32 intermediates (scores, exp, temps)
        return f

    # OL tile: as large as possible (<=256, multiple of 8); make sure the grid has
    # >= 2 parallel steps so both v7x TensorCores get work on single-batch calls.
    olt = min(_round_up(OL, 8), 256)
    if B == 1 and _round_up(OL, 8) <= olt and OL > 8:
        olt = _round_up(-(-OL // 2), 8)

    QLr = _round_up(QL, 128)
    if (kv_tile is None or int(kv_tile) >= QL) and _footprint(olt, QLr) <= tile_budget:
        # Short/medium context: one full-QL tile, no padding, no recompute.
        qlt, QLp, k_tiles = QL, QL, 1
    else:
        max_kv = QLr if kv_tile is None else max(
            128, _round_up(min(int(kv_tile), QLr), 128))
        qlt = None
        while qlt is None:
            for cand in (2048, 1024, 512, 256, 128):
                if cand <= max_kv and _footprint(olt, cand) <= tile_budget:
                    qlt = cand
                    break
            if qlt is None:
                if olt > 8:
                    olt = max(8, _round_up(olt // 2, 8))
                else:
                    qlt = min(128, max_kv)        # smallest legal tile
        QLp = _round_up(QL, qlt)
        k_tiles = QLp // qlt
        if k_tiles == 1:                          # degenerate: cheaper single pass
            qlt, QLp = QL, QL

    OLp = _round_up(OL, olt)
    single = k_tiles == 1

    # nn.Linear computes y = x @ W^T; pre-transpose / split so linear_out needs no
    # in-kernel concat: concat(mix, qg) @ W_out^T == mix @ Wo[:D] + qg @ Wo[D:].
    win_t = w_in.T.astype(cdt)                    # (D, D)
    wo_t = w_out.T                                # (2D, D)
    wo_mix = wo_t[:D, :].astype(cdt)
    wo_q = wo_t[D:, :].astype(cdt)

    # Only pad axes that need it (feature axis is never padded).
    q_p = query
    if OLp != OL:
        q_p = jnp.pad(q_p, ((0, 0), (0, OLp - OL), (0, 0)))
    q_p = q_p.astype(cdt)
    c_p = context
    if QLp != QL:
        c_p = jnp.pad(c_p, ((0, 0), (0, QLp - QL), (0, 0)))
    c_p = c_p.astype(cdt)

    out_shapes = (jax.ShapeDtypeStruct((B, OLp, D), out_dtype),
                  jax.ShapeDtypeStruct((B, OLp, QLp), wts_dtype))

    # Advisory cost estimate so XLA schedules producers/consumers sensibly.
    score_passes = 1 if single else 2
    flops = (2 * B * OLp * D * D                       # linear_in
             + score_passes * 2 * B * OLp * QLp * D    # scores (x2 when tiled)
             + 2 * B * OLp * QLp * D                   # mix
             + 4 * B * OLp * D * D)                    # linear_out
    transcendentals = score_passes * B * OLp * QLp + B * OLp * D
    bytes_accessed = (q_p.size * q_p.dtype.itemsize
                      + score_passes * c_p.size * c_p.dtype.itemsize
                      + 3 * D * D * cs
                      + B * OLp * D * osz
                      + B * OLp * QLp * wsz)
    cost = pl.CostEstimate(flops=int(flops), transcendentals=int(transcendentals),
                           bytes_accessed=int(bytes_accessed))

    # Grid-invariant weight operands: single-buffered (double-buffering an
    # invariant block only wastes VMEM).
    wbuf = pl.Buffered(1)

    if single:
        grid = (B, OLp // olt)
        grid_spec = pltpu.PrefetchScalarGridSpec(
            num_scalar_prefetch=0,
            grid=grid,
            in_specs=[
                pl.BlockSpec((pl.Squeezed(), olt, D), lambda b, o: (b, o, 0)),
                pl.BlockSpec((pl.Squeezed(), QLp, D), lambda b, o: (b, 0, 0)),
                pl.BlockSpec((D, D), lambda b, o: (0, 0), pipeline_mode=wbuf),
                pl.BlockSpec((D, D), lambda b, o: (0, 0), pipeline_mode=wbuf),
                pl.BlockSpec((D, D), lambda b, o: (0, 0), pipeline_mode=wbuf),
            ],
            out_specs=[
                pl.BlockSpec((pl.Squeezed(), olt, D), lambda b, o: (b, o, 0)),
                pl.BlockSpec((pl.Squeezed(), olt, QLp), lambda b, o: (b, o, 0)),
            ],
        )
        kernel = functools.partial(_attn_kernel_single,
                                   exp_dtype=edt, approx_recip=approx_recip)
        dim_sem = ("parallel", "parallel")
    else:
        grid = (B, OLp // olt, 2 * k_tiles)
        grid_spec = pltpu.PrefetchScalarGridSpec(
            num_scalar_prefetch=0,
            grid=grid,
            in_specs=[
                pl.BlockSpec((pl.Squeezed(), olt, D), lambda b, o, k: (b, o, 0)),
                pl.BlockSpec((pl.Squeezed(), qlt, D),
                             lambda b, o, k: (b, k % k_tiles, 0)),
                pl.BlockSpec((D, D), lambda b, o, k: (0, 0), pipeline_mode=wbuf),
                pl.BlockSpec((D, D), lambda b, o, k: (0, 0), pipeline_mode=wbuf),
                pl.BlockSpec((D, D), lambda b, o, k: (0, 0), pipeline_mode=wbuf),
            ],
            out_specs=[
                pl.BlockSpec((pl.Squeezed(), olt, D), lambda b, o, k: (b, o, 0)),
                # Phase-1 steps park on block 0 (no writeback); phase-2 step j
                # writes block j, which is flushed exactly once with real values.
                pl.BlockSpec((pl.Squeezed(), olt, qlt),
                             lambda b, o, k: (b, o, jnp.maximum(k - k_tiles, 0))),
            ],
            scratch_shapes=[
                pltpu.VMEM((olt, D), cdt),            # qg = q @ W_in^T
                pltpu.VMEM((olt, 1), jnp.float32),    # running max
                pltpu.VMEM((olt, 1), jnp.float32),    # running sum, then 1/sum
                pltpu.VMEM((olt, D), jnp.float32),    # unnormalized mix accumulator
            ],
        )
        kernel = functools.partial(_attn_kernel_tiled,
                                   k_tiles=k_tiles, kv_tile=qlt,
                                   valid_ql=(QL if QLp != QL else None),
                                   exp_dtype=edt, approx_recip=approx_recip)
        dim_sem = ("parallel", "parallel", "arbitrary")

    out_p, wts_p = pl.pallas_call(
        kernel,
        out_shape=out_shapes,
        grid_spec=grid_spec,
        compiler_params=pltpu.CompilerParams(
            dimension_semantics=dim_sem,
            vmem_limit_bytes=int(vmem_limit)),
        cost_estimate=cost,
    )(q_p, c_p, win_t, wo_mix, wo_q)

    if OLp != OL:
        out_p = out_p[:, :OL, :]
        wts_p = wts_p[:, :OL, :]
    if QLp != QL:
        wts_p = wts_p[:, :, :QL]
    return out_p, wts_p


def attention_general_ref(query, context, w_in, w_out):
    """Pure-JAX reference mirroring the PyTorch forward (context_mask=None)."""
    qg = jnp.einsum('bod,ed->boe', query, w_in)                  # linear_in
    scores = jnp.einsum('bod,bqd->boq', qg, context)
    w = jax.nn.softmax(scores, axis=-1)
    w = jnp.nan_to_num(w)
    mix = jnp.einsum('boq,bqd->bod', w, context)
    combined = jnp.concatenate([mix, qg], axis=-1)
    out = jnp.tanh(jnp.einsum('boc,dc->bod', combined, w_out))   # linear_out
    return out, w


if __name__ == "__main__":
    key = jax.random.PRNGKey(0)
    k1, k2, k3, k4, k5, k6, k7, k8 = jax.random.split(key, 8)

    # ---- 1) small shapes (single-KV-tile fast path), strict f32 check ----------
    B, OL, QL, D = 2, 8, 8, 32
    query = jax.random.normal(k1, (B, OL, D), dtype=jnp.float32)
    context = jax.random.normal(k2, (B, QL, D), dtype=jnp.float32)
    w_in = jax.random.uniform(k3, (D, D), minval=-1.0 / np.sqrt(D),
                              maxval=1.0 / np.sqrt(D), dtype=jnp.float32)
    w_out = jax.random.uniform(k4, (D, 2 * D), minval=-1.0 / np.sqrt(2 * D),
                               maxval=1.0 / np.sqrt(2 * D), dtype=jnp.float32)

    o_ref, w_ref = attention_general_ref(query, context, w_in, w_out)
    o, w = attention_general(query, context, w_in, w_out)
    jax.block_until_ready((o, w))
    np.testing.assert_allclose(np.asarray(o), np.asarray(o_ref), rtol=1e-5, atol=1e-5)
    np.testing.assert_allclose(np.asarray(w), np.asarray(w_ref), rtol=1e-5, atol=1e-5)

    # ---- 2) KV-tiled online-softmax path (forced kv_tile) with context padding --
    B2, OL2, QL2, D2 = 2, 16, 320, 64
    q2 = jax.random.normal(k5, (B2, OL2, D2), dtype=jnp.float32)
    c2 = jax.random.normal(k6, (B2, QL2, D2), dtype=jnp.float32)
    w_in2 = jax.random.uniform(k7, (D2, D2), minval=-1.0 / np.sqrt(D2),
                               maxval=1.0 / np.sqrt(D2), dtype=jnp.float32)
    w_out2 = jax.random.uniform(k8, (D2, 2 * D2), minval=-1.0 / np.sqrt(2 * D2),
                                maxval=1.0 / np.sqrt(2 * D2), dtype=jnp.float32)
    o2_ref, w2_ref = attention_general_ref(q2, c2, w_in2, w_out2)
    o2, w2 = attention_general(q2, c2, w_in2, w_out2, kv_tile=128)
    jax.block_until_ready((o2, w2))
    np.testing.assert_allclose(np.asarray(o2), np.asarray(o2_ref), rtol=1e-4, atol=1e-4)
    np.testing.assert_allclose(np.asarray(w2), np.asarray(w2_ref), rtol=1e-4, atol=1e-4)

    # ---- 3) bf16 MXU operands + bf16 exp (v6e/v7x fast path; valid on v5e too) --
    o_bf, w_bf = attention_general(query, context, w_in, w_out,
                                   matmul_dtype=jnp.bfloat16,
                                   exp_dtype=jnp.bfloat16)
    jax.block_until_ready((o_bf, w_bf))
    np.testing.assert_allclose(np.asarray(o_bf), np.asarray(o_ref), rtol=5e-2, atol=5e-2)
    np.testing.assert_allclose(np.asarray(w_bf), np.asarray(w_ref), rtol=5e-2, atol=5e-2)

    print("KERNEL_OK")
</pallas_src>

<mosaic_0001>
module attributes {stable_mosaic.version = 11 : i64} {
  func.func @_attn_kernel_single(%arg0: i32, %arg1: i32, %arg2: memref<1x8x32xf32, #tpu.memory_space<vmem>>, %arg3: memref<1x8x32xf32, #tpu.memory_space<vmem>>, %arg4: memref<32x32xf32, #tpu.memory_space<vmem>>, %arg5: memref<32x32xf32, #tpu.memory_space<vmem>>, %arg6: memref<32x32xf32, #tpu.memory_space<vmem>>, %arg7: memref<1x8x32xf32, #tpu.memory_space<vmem>>, %arg8: memref<1x8x8xf32, #tpu.memory_space<vmem>>) attributes {dimension_semantics = [#tpu.dimension_semantics<parallel>, #tpu.dimension_semantics<parallel>], iteration_bounds = array<i64: 2, 1>, scalar_prefetch = 0 : i64, scratch_operands = 0 : i64, tpu.core_type = #tpu.core_type<tc>, window_params = [{transform_indices = @transform_0, window_bounds = array<i64: 1, 8, 32>}, {transform_indices = @transform_1, window_bounds = array<i64: 1, 8, 32>}, {pipeline_mode = #tpu.pipeline_mode<synchronous>, transform_indices = @transform_2, window_bounds = array<i64: 32, 32>}, {pipeline_mode = #tpu.pipeline_mode<synchronous>, transform_indices = @transform_3, window_bounds = array<i64: 32, 32>}, {pipeline_mode = #tpu.pipeline_mode<synchronous>, transform_indices = @transform_4, window_bounds = array<i64: 32, 32>}, {transform_indices = @transform_5, window_bounds = array<i64: 1, 8, 32>}, {transform_indices = @transform_6, window_bounds = array<i64: 1, 8, 8>}]} {
    %c0 = arith.constant 0 : index
    %c0_0 = arith.constant 0 : index
    %c0_1 = arith.constant 0 : index
    %0 = vector.load %arg2[%c0, %c0_0, %c0_1] : memref<1x8x32xf32, #tpu.memory_space<vmem>>, vector<1x8x32xf32>
    %1 = vector.shape_cast %0 : vector<1x8x32xf32> to vector<8x32xf32>
    %c0_2 = arith.constant 0 : index
    %c0_3 = arith.constant 0 : index
    %c0_4 = arith.constant 0 : index
    %2 = vector.load %arg3[%c0_2, %c0_3, %c0_4] : memref<1x8x32xf32, #tpu.memory_space<vmem>>, vector<1x8x32xf32>
    %3 = vector.shape_cast %2 : vector<1x8x32xf32> to vector<8x32xf32>
    %c0_5 = arith.constant 0 : index
    %c0_6 = arith.constant 0 : index
    %4 = vector.load %arg4[%c0_5, %c0_6] : memref<32x32xf32, #tpu.memory_space<vmem>>, vector<32x32xf32>
    %cst = arith.constant dense<0.000000e+00> : vector<8x32xf32>
    %5 = tpu.matmul %1, %4, %cst {dimension_numbers = #tpu.dot_dimension_numbers<[1], [0], [0], [1], [0, 0, 1, 1], [], []>} : vector<8x32xf32>, vector<32x32xf32>, vector<8x32xf32> -> vector<8x32xf32>
    %cst_7 = arith.constant dense<0.000000e+00> : vector<8x8xf32>
    %6 = tpu.matmul %5, %3, %cst_7 {dimension_numbers = #tpu.dot_dimension_numbers<[1], [1], [0], [0], [0, 0, 1, 0], [], []>} : vector<8x32xf32>, vector<8x32xf32>, vector<8x8xf32> -> vector<8x8xf32>
    %cst_8 = arith.constant dense<0xFF800000> : vector<8xf32>
    %7 = vector.multi_reduction <maximumf>, %6, %cst_8 [1] : vector<8x8xf32> to vector<8xf32>
    %8 = vector.shape_cast %7 : vector<8xf32> to vector<8x1xf32>
    %9 = vector.broadcast %8 : vector<8x1xf32> to vector<8x8xf32>
    %10 = arith.subf %6, %9 : vector<8x8xf32>
    %11 = math.exp %10 : vector<8x8xf32>
    %cst_9 = arith.constant dense<0.000000e+00> : vector<8xf32>
    %12 = vector.multi_reduction <add>, %11, %cst_9 [1] : vector<8x8xf32> to vector<8xf32>
    %13 = vector.shape_cast %12 : vector<8xf32> to vector<8x1xf32>
    %14 = tpu.reciprocal %13 : vector<8x1xf32> -> vector<8x1xf32>
    %15 = vector.broadcast %14 : vector<8x1xf32> to vector<8x8xf32>
    %16 = arith.mulf %11, %15 : vector<8x8xf32>
    %cst_10 = arith.constant dense<0.000000e+00> : vector<8x32xf32>
    %17 = tpu.matmul %16, %3, %cst_10 {dimension_numbers = #tpu.dot_dimension_numbers<[1], [0], [0], [1], [0, 0, 1, 1], [], []>} : vector<8x8xf32>, vector<8x32xf32>, vector<8x32xf32> -> vector<8x32xf32>
    %c0_11 = arith.constant 0 : index
    %c0_12 = arith.constant 0 : index
    %18 = vector.load %arg5[%c0_11, %c0_12] : memref<32x32xf32, #tpu.memory_space<vmem>>, vector<32x32xf32>
    %cst_13 = arith.constant dense<0.000000e+00> : vector<8x32xf32>
    %19 = tpu.matmul %17, %18, %cst_13 {dimension_numbers = #tpu.dot_dimension_numbers<[1], [0], [0], [1], [0, 0, 1, 1], [], []>} : vector<8x32xf32>, vector<32x32xf32>, vector<8x32xf32> -> vector<8x32xf32>
    %c0_14 = arith.constant 0 : index
    %c0_15 = arith.constant 0 : index
    %20 = vector.load %arg6[%c0_14, %c0_15] : memref<32x32xf32, #tpu.memory_space<vmem>>, vector<32x32xf32>
    %cst_16 = arith.constant dense<0.000000e+00> : vector<8x32xf32>
    %21 = tpu.matmul %5, %20, %cst_16 {dimension_numbers = #tpu.dot_dimension_numbers<[1], [0], [0], [1], [0, 0, 1, 1], [], []>} : vector<8x32xf32>, vector<32x32xf32>, vector<8x32xf32> -> vector<8x32xf32>
    %22 = arith.addf %19, %21 : vector<8x32xf32>
    %23 = math.tanh %22 : vector<8x32xf32>
    %c0_17 = arith.constant 0 : index
    %c0_18 = arith.constant 0 : index
    %c0_19 = arith.constant 0 : index
    %24 = vector.load %arg7[%c0_17, %c0_18, %c0_19] : memref<1x8x32xf32, #tpu.memory_space<vmem>>, vector<1x8x32xf32>
    %25 = vector.shape_cast %24 : vector<1x8x32xf32> to vector<8x32xf32>
    %26 = vector.shape_cast %23 : vector<8x32xf32> to vector<1x8x32xf32>
    tpu.vector_store %arg7[%c0_17, %c0_18, %c0_19], %26 {strides = array<i32>} : memref<1x8x32xf32, #tpu.memory_space<vmem>>, vector<1x8x32xf32>,
    %c0_20 = arith.constant 0 : index
    %c0_21 = arith.constant 0 : index
    %c0_22 = arith.constant 0 : index
    %27 = vector.load %arg8[%c0_20, %c0_21, %c0_22] : memref<1x8x8xf32, #tpu.memory_space<vmem>>, vector<1x8x8xf32>
    %28 = vector.shape_cast %27 : vector<1x8x8xf32> to vector<8x8xf32>
    %29 = vector.shape_cast %16 : vector<8x8xf32> to vector<1x8x8xf32>
    tpu.vector_store %arg8[%c0_20, %c0_21, %c0_22], %29 {strides = array<i32>} : memref<1x8x8xf32, #tpu.memory_space<vmem>>, vector<1x8x8xf32>,
    return
  }
  func.func @transform_0(%arg0: i32, %arg1: i32) -> (i32, i32, i32) {
    %c0_i32 = arith.constant 0 : i32
    %c0_i32_0 = arith.constant 0 : i32
    return %arg0, %arg1, %c0_i32 : i32, i32, i32
  }
  func.func @transform_1(%arg0: i32, %arg1: i32) -> (i32, i32, i32) {
    %c0_i32 = arith.constant 0 : i32
    %c0_i32_0 = arith.constant 0 : i32
    %c0_i32_1 = arith.constant 0 : i32
    return %arg0, %c0_i32, %c0_i32_0 : i32, i32, i32
  }
  func.func @transform_2(%arg0: i32, %arg1: i32) -> (i32, i32) {
    %c0_i32 = arith.constant 0 : i32
    %c0_i32_0 = arith.constant 0 : i32
    %c0_i32_1 = arith.constant 0 : i32
    return %c0_i32, %c0_i32_0 : i32, i32
  }
  func.func @transform_3(%arg0: i32, %arg1: i32) -> (i32, i32) {
    %c0_i32 = arith.constant 0 : i32
    %c0_i32_0 = arith.constant 0 : i32
    %c0_i32_1 = arith.constant 0 : i32
    return %c0_i32, %c0_i32_0 : i32, i32
  }
  func.func @transform_4(%arg0: i32, %arg1: i32) -> (i32, i32) {
    %c0_i32 = arith.constant 0 : i32
    %c0_i32_0 = arith.constant 0 : i32
    %c0_i32_1 = arith.constant 0 : i32
    return %c0_i32, %c0_i32_0 : i32, i32
  }
  func.func @transform_5(%arg0: i32, %arg1: i32) -> (i32, i32, i32) {
    %c0_i32 = arith.constant 0 : i32
    %c0_i32_0 = arith.constant 0 : i32
    return %arg0, %arg1, %c0_i32 : i32, i32, i32
  }
  func.func @transform_6(%arg0: i32, %arg1: i32) -> (i32, i32, i32) {
    %c0_i32 = arith.constant 0 : i32
    %c0_i32_0 = arith.constant 0 : i32
    return %arg0, %arg1, %c0_i32 : i32, i32, i32
  }
}

</mosaic_0001>

<llo_original>
// kernel: tpu_custom_call.1
$region0: #{tpu_custom_call.1}
  #allocation0 [shape = 'u32[]', space=smem, size = 0x4, offset = 0x4, fixed_abs, tag = 'smem constant byte address 0x4 - core index']
  #allocation1 [shape = 'u32[144,128]{1,0:T(1,128)}', space=vmem, size = 0x12000, scoped, tag = 'internal scratch']
  %s0 = inlined_call_operand.hbm [shape: f32[2,8,32], index: 0, kind: input, shape index: {}]
  %s1 = inlined_call_operand.hbm [shape: f32[2,8,32], index: 1, kind: input, shape index: {}]
  %s2 = inlined_call_operand.hbm [shape: f32[32,32], index: 2, kind: input, shape index: {}]
  %s3 = inlined_call_operand.hbm [shape: f32[32,32], index: 3, kind: input, shape index: {}]
  %s4 = inlined_call_operand.hbm [shape: f32[32,32], index: 4, kind: input, shape index: {}]
  %s5 = inlined_call_operand.hbm [shape: f32[2,8,32], index: 5, kind: output, shape index: {0}]
  %s6 = inlined_call_operand.hbm [shape: f32[2,8,8], index: 6, kind: output, shape index: {1}]
  %7 = xla_tuple %s5, %s6
  %s8 = sld [smem:[#allocation0]]
  $region81: #{tpu_custom_call.1} parent=0
    _
  %s10 = ssub.s32 1, %s8
  %s11 = scalar_select 0, %s10, %s8
  $region1: #{tpu_custom_call.1} parent=0
    #allocation2 [shape = 'u8[8192]{0}', space=vmem, size = 0x2000, scoped, tag = 'input window, operand 0']
    #allocation3 [shape = 's32[2]{0}', space=sflag, size = 0x8, scoped, tag = 'scoped memory for tpu_custom_call.1']
    #allocation4 [shape = 's32[2]{0}', space=sflag, size = 0x8, scoped, tag = 'scoped memory for tpu_custom_call.1']
    #allocation5 [shape = 'u8[8192]{0}', space=vmem, size = 0x2000, scoped, tag = 'input window, operand 1']
    #allocation6 [shape = 's32[2]{0}', space=sflag, size = 0x8, scoped, tag = 'scoped memory for tpu_custom_call.1']
    #allocation7 [shape = 'u8[16384]{0}', space=vmem, size = 0x4000, scoped, tag = 'input window, operand 2, single buffered']
    #allocation8 [shape = 'u8[16384]{0}', space=vmem, size = 0x4000, scoped, tag = 'input window, operand 3, single buffered']
    #allocation9 [shape = 's32[1]{0}', space=sflag, size = 0x4, scoped, tag = 'scoped memory for tpu_custom_call.1']
    #allocation10 [shape = 'u8[16384]{0}', space=vmem, size = 0x4000, scoped, tag = 'input window, operand 4, single buffered']
    #allocation11 [shape = 'u8[8192]{0}', space=vmem, size = 0x2000, scoped, tag = 'output window, operand 0']
    #allocation12 [shape = 'u8[8192]{0}', space=vmem, size = 0x2000, scoped, tag = 'output window, operand 1']
    #allocation13 [shape = 's32[2]{0}', space=sflag, size = 0x8, scoped, tag = 'scoped memory for tpu_custom_call.1']
    %12 = vsyncpa [#allocation3], 0
    %s13 = scalar_lea.sflag [#allocation3], 1
    %14 = vsyncpa %s13, 0
    %15 = vsyncpa [#allocation6], 0
    %s16 = scalar_lea.sflag [#allocation6], 1
    %17 = vsyncpa %s16, 0
    %18 = vsyncpa [#allocation9], 0
    %19 = vsyncpa [#allocation4], 0
    %s20 = scalar_lea.sflag [#allocation4], 1
    %21 = vsyncpa %s20, 0
    %22 = vsyncpa [#allocation13], 0
    %s23 = scalar_lea.sflag [#allocation13], 1
    %24 = vsyncpa %s23, 0
    loop: start=0, step=1, limit=4
    $region2: #{tpu_custom_call.1} parent=1 // loop_pre_header
      _
    $region3: #{tpu_custom_call.1} parent=1 // loop_header
      %s26 = sphi 0, %s30
      %p27 = scmp.ge.s32.totalorder %s26, 4
      %s33 = sphi 0, %s45
      %s34 = sphi 0, %s41
      %s35 = sphi 0, %s33
      %s36 = sphi 0, %s34
      %s37 = sphi 0, %s35
      %s38 = sphi 0, %s36
      %s50 = sphi 0, %s52
      %s53 = sphi 0, %s50
      %s54 = sphi 0, %s53
      %s70 = sphi 0, %s54
      %s76 = sphi 0, %s78
      %s79 = sphi 0, %s76
      %s80 = sphi 0, %s79
      %s96 = sphi 0, %s80
      %s100 = sphi 0, %s100
      %s102 = sphi 0, %s100
      %s103 = sphi 0, %s102
      %s117 = sphi 0, %s103
      %s121 = sphi 0, %s121
      %s123 = sphi 0, %s121
      %s124 = sphi 0, %s123
      %s138 = sphi 0, %s124
      %s142 = sphi 0, %s142
      %s144 = sphi 0, %s142
      %s145 = sphi 0, %s144
      %s159 = sphi 0, %s145
      %s167 = sphi 0, %s169
      %s170 = sphi 0, %s167
      %s171 = sphi 0, %s170
      %s187 = sphi 0, %s171
      %s195 = sphi 0, %s197
      %s198 = sphi 0, %s195
      %s199 = sphi 0, %s198
      %s215 = sphi 0, %s199
    $region4: #{tpu_custom_call.1} parent=1 // loop_header_branch
      %29 = sbr.rel (%p27) target = $region8
    $region5: #{tpu_custom_call.1} parent=1 // loop_body
      %s31 = ssub.s32 %s26, 1
      %s32 = ssub.s32 %s26, 2
      %s39 = sadd.s32 1, %s34
      %p40 = scmp.ge.s32.totalorder %s39, 1
      %s41 = scalar_select %p40, 0, %s39
      %s42 = sadd.s32 1, %s33
      %s43 = scalar_select %p40, %s42, %s33
      %p44 = scmp.ge.s32.totalorder %s43, 2
      %s45 = scalar_select %p44, 0, %s43
      %s46 = ssub.s32 %s33, %s45
      %s47 = ssub.s32 %s34, %s41
      %s48 = sor.u32 %s46, %s47
      %p49 = scmp.eq.s32.totalorder %s48, 0
      %s51 = sadd.s32 %s50, 1
      %s52 = scalar_select %p49, %s50, %s51
      %p55 = pneg %p49
      %p56 = scmp.eq.s32.totalorder %s26, 1
      %p57 = por %p55, %p56
      %p58 = scmp.ne.s32.totalorder %s50, %s53
      %p59 = scmp.eq.s32.totalorder %s26, 0
      %p60 = por %p58, %p59
      %p61 = scmp.ne.s32.totalorder %s50, %s53
      %p62 = scmp.eq.s32.totalorder %s31, 1
      %p63 = por %p61, %p62
      %p64 = scmp.ne.s32.totalorder %s53, %s54
      %p65 = scmp.eq.s32.totalorder %s31, 0
      %p66 = por %p64, %p65
      %p67 = scmp.ne.s32.totalorder %s53, %s54
      %p68 = scmp.eq.s32.totalorder %s32, 1
      %p69 = por %p67, %p68
      %p71 = scmp.ne.s32.totalorder %s54, %s70
      %p72 = scmp.eq.s32.totalorder %s32, 0
      %p73 = por %p71, %p72
      %s74 = ssub.s32 %s33, %s45
      %p75 = scmp.eq.s32.totalorder %s74, 0
      %s77 = sadd.s32 %s76, 1
      %s78 = scalar_select %p75, %s76, %s77
      %p81 = pneg %p75
      %p82 = scmp.eq.s32.totalorder %s26, 1
      %p83 = por %p81, %p82
      %p84 = scmp.ne.s32.totalorder %s76, %s79
      %p85 = scmp.eq.s32.totalorder %s26, 0
      %p86 = por %p84, %p85
      %p87 = scmp.ne.s32.totalorder %s76, %s79
      %p88 = scmp.eq.s32.totalorder %s31, 1
      %p89 = por %p87, %p88
      %p90 = scmp.ne.s32.totalorder %s79, %s80
      %p91 = scmp.eq.s32.totalorder %s31, 0
      %p92 = por %p90, %p91
      %p93 = scmp.ne.s32.totalorder %s79, %s80
      %p94 = scmp.eq.s32.totalorder %s32, 1
      %p95 = por %p93, %p94
      %p97 = scmp.ne.s32.totalorder %s80, %s96
      %p98 = scmp.eq.s32.totalorder %s32, 0
      %p99 = por %p97, %p98
      %s101 = sadd.s32 %s100, 1
      %p104 = scmp.eq.s32.totalorder %s26, 1
      %p105 = scmp.ne.s32.totalorder %s100, %s102
      %p106 = scmp.eq.s32.totalorder %s26, 0
      %p107 = por %p105, %p106
      %p108 = scmp.ne.s32.totalorder %s100, %s102
      %p109 = scmp.eq.s32.totalorder %s31, 1
      %p110 = por %p108, %p109
      %p111 = scmp.ne.s32.totalorder %s102, %s103
      %p112 = scmp.eq.s32.totalorder %s31, 0
      %p113 = por %p111, %p112
      %p114 = scmp.ne.s32.totalorder %s102, %s103
      %p115 = scmp.eq.s32.totalorder %s32, 1
      %p116 = por %p114, %p115
      %p118 = scmp.ne.s32.totalorder %s103, %s117
      %p119 = scmp.eq.s32.totalorder %s32, 0
      %p120 = por %p118, %p119
      %s122 = sadd.s32 %s121, 1
      %p125 = scmp.eq.s32.totalorder %s26, 1
      %p126 = scmp.ne.s32.totalorder %s121, %s123
      %p127 = scmp.eq.s32.totalorder %s26, 0
      %p128 = por %p126, %p127
      %p129 = scmp.ne.s32.totalorder %s121, %s123
      %p130 = scmp.eq.s32.totalorder %s31, 1
      %p131 = por %p129, %p130
      %p132 = scmp.ne.s32.totalorder %s123, %s124
      %p133 = scmp.eq.s32.totalorder %s31, 0
      %p134 = por %p132, %p133
      %p135 = scmp.ne.s32.totalorder %s123, %s124
      %p136 = scmp.eq.s32.totalorder %s32, 1
      %p137 = por %p135, %p136
      %p139 = scmp.ne.s32.totalorder %s124, %s138
      %p140 = scmp.eq.s32.totalorder %s32, 0
      %p141 = por %p139, %p140
      %s143 = sadd.s32 %s142, 1
      %p146 = scmp.eq.s32.totalorder %s26, 1
      %p147 = scmp.ne.s32.totalorder %s142, %s144
      %p148 = scmp.eq.s32.totalorder %s26, 0
      %p149 = por %p147, %p148
      %p150 = scmp.ne.s32.totalorder %s142, %s144
      %p151 = scmp.eq.s32.totalorder %s31, 1
      %p152 = por %p150, %p151
      %p153 = scmp.ne.s32.totalorder %s144, %s145
      %p154 = scmp.eq.s32.totalorder %s31, 0
      %p155 = por %p153, %p154
      %p156 = scmp.ne.s32.totalorder %s144, %s145
      %p157 = scmp.eq.s32.totalorder %s32, 1
      %p158 = por %p156, %p157
      %p160 = scmp.ne.s32.totalorder %s145, %s159
      %p161 = scmp.eq.s32.totalorder %s32, 0
      %p162 = por %p160, %p161
      %s163 = ssub.s32 %s33, %s45
      %s164 = ssub.s32 %s34, %s41
      %s165 = sor.u32 %s163, %s164
      %p166 = scmp.eq.s32.totalorder %s165, 0
      %s168 = sadd.s32 %s167, 1
      %s169 = scalar_select %p166, %s167, %s168
      %p172 = pneg %p166
      %p173 = scmp.eq.s32.totalorder %s26, 1
      %p174 = por %p172, %p173
      %p175 = scmp.ne.s32.totalorder %s167, %s170
      %p176 = scmp.eq.s32.totalorder %s26, 0
      %p177 = por %p175, %p176
      %p178 = scmp.ne.s32.totalorder %s167, %s170
      %p179 = scmp.eq.s32.totalorder %s31, 1
      %p180 = por %p178, %p179
      %p181 = scmp.ne.s32.totalorder %s170, %s171
      %p182 = scmp.eq.s32.totalorder %s31, 0
      %p183 = por %p181, %p182
      %p184 = scmp.ne.s32.totalorder %s170, %s171
      %p185 = scmp.eq.s32.totalorder %s32, 1
      %p186 = por %p184, %p185
      %p188 = scmp.ne.s32.totalorder %s171, %s187
      %p189 = scmp.eq.s32.totalorder %s32, 0
      %p190 = por %p188, %p189
      %s191 = ssub.s32 %s33, %s45
      %s192 = ssub.s32 %s34, %s41
      %s193 = sor.u32 %s191, %s192
      %p194 = scmp.eq.s32.totalorder %s193, 0
      %s196 = sadd.s32 %s195, 1
      %s197 = scalar_select %p194, %s195, %s196
      %p200 = pneg %p194
      %p201 = scmp.eq.s32.totalorder %s26, 1
      %p202 = por %p200, %p201
      %p203 = scmp.ne.s32.totalorder %s195, %s198
      %p204 = scmp.eq.s32.totalorder %s26, 0
      %p205 = por %p203, %p204
      %p206 = scmp.ne.s32.totalorder %s195, %s198
      %p207 = scmp.eq.s32.totalorder %s31, 1
      %p208 = por %p206, %p207
      %p209 = scmp.ne.s32.totalorder %s198, %s199
      %p210 = scmp.eq.s32.totalorder %s31, 0
      %p211 = por %p209, %p210
      %p212 = scmp.ne.s32.totalorder %s198, %s199
      %p213 = scmp.eq.s32.totalorder %s32, 1
      %p214 = por %p212, %p213
      %p216 = scmp.ne.s32.totalorder %s199, %s215
      %p217 = scmp.eq.s32.totalorder %s32, 0
      %p218 = por %p216, %p217
      %p219 = scmp.le.s32.totalorder 1, %s26
      %p220 = scmp.lt.s32.totalorder %s26, 3
      %p221 = pnand %p219, %p220
      %p222 = pneg %p221
      // Predicated region
      $region9: #{tpu_custom_call.1} parent=5 // pred_check
        _
      $region10: #{tpu_custom_call.1} parent=5 // pred_check_branch
        %224 = sbr.rel (%p221) target = $region12
      $region11: #{tpu_custom_call.1} parent=5 // pred_region
        %s225 = ssub.s32 %s26, 1
        // Predicated region
        $region13: #{tpu_custom_call.1} parent=11 // pred_check
          %p226 = pneg %p113
        $region14: #{tpu_custom_call.1} parent=11 // pred_check_branch
          %228 = sbr.rel (%p226) target = $region16
        $region15: #{tpu_custom_call.1} parent=11 // pred_region
          %s230 = ssub.s32 512, 512
          %231 = vsyncadd [#allocation6], %s230
          %s232 = sshll.u32 [#allocation7], 4
          %s233 = int_to_ptr.vmem [resolvable:$true] %s232
          %238 = dma.hbm_to_vmem [thread:$0]  %s2, 512, %s233, [#allocation6], 128, 128, 8
        $region16: #{tpu_custom_call.1} parent=11 // pred_fallthru
          _
        // Predicated region
        $region17: #{tpu_custom_call.1} parent=11 // pred_check
          %p239 = pneg %p134
        $region18: #{tpu_custom_call.1} parent=11 // pred_check_branch
          %241 = sbr.rel (%p239) target = $region20
        $region19: #{tpu_custom_call.1} parent=11 // pred_region
          %s243 = ssub.s32 512, 512
          %244 = vsyncadd [#allocation9], %s243
          %s245 = sshll.u32 [#allocation8], 4
          %s246 = int_to_ptr.vmem [resolvable:$true] %s245
          %251 = dma.hbm_to_vmem [thread:$0]  %s3, 512, %s246, [#allocation9], 128, 128, 8
        $region20: #{tpu_custom_call.1} parent=11 // pred_fallthru
          _
        // Predicated region
        $region21: #{tpu_custom_call.1} parent=11 // pred_check
          %p252 = pneg %p155
        $region22: #{tpu_custom_call.1} parent=11 // pred_check_branch
          %254 = sbr.rel (%p252) target = $region24
        $region23: #{tpu_custom_call.1} parent=11 // pred_region
          %s256 = ssub.s32 512, 512
          %257 = vsyncadd [#allocation9], %s256
          %s258 = sshll.u32 [#allocation10], 4
          %s259 = int_to_ptr.vmem [resolvable:$true] %s258
          %264 = dma.hbm_to_vmem [thread:$0]  %s4, 512, %s259, [#allocation9], 128, 128, 8
        $region24: #{tpu_custom_call.1} parent=11 // pred_fallthru
          _
      $region12: #{tpu_custom_call.1} parent=5 // pred_fallthru
        _
      %p265 = scmp.lt.s32.totalorder %s26, 2
      // Predicated region
      $region25: #{tpu_custom_call.1} parent=5 // pred_check
        %p266 = pneg %p265
      $region26: #{tpu_custom_call.1} parent=5 // pred_check_branch
        %268 = sbr.rel (%p266) target = $region28
      $region27: #{tpu_custom_call.1} parent=5 // pred_region
        // Predicated region
        $region29: #{tpu_custom_call.1} parent=27 // pred_check
          %p269 = pneg %p60
        $region30: #{tpu_custom_call.1} parent=27 // pred_check_branch
          %271 = sbr.rel (%p269) target = $region32
        $region31: #{tpu_custom_call.1} parent=27 // pred_region
          %s272 = sand.u32 %s50, 1
          %s273 = scalar_lea.sflag [#allocation3], %s272
          %s274 = sand.u32 %s50, 1
          %s275 = smul.addr %s274, 8
          %s276 = scalar_lea.vmem [#allocation2], %s275
          %s278 = ssub.s32 128, 128
          %279 = vsyncadd %s273, %s278
          %s280 = sadd.s32 %s34, %s33
          %s281 = smul.addr %s280, 128
          %s282 = scalar_lea.hbm %s0, %s281
          %s284 = sshll.u32 %s276, 4
          %s285 = int_to_ptr.vmem [resolvable:$true] %s284
          %287 = dma.hbm_to_vmem [thread:$0]  %s282, 128, %s285, %s273
        $region32: #{tpu_custom_call.1} parent=27 // pred_fallthru
          _
        // Predicated region
        $region33: #{tpu_custom_call.1} parent=27 // pred_check
          %p288 = pneg %p86
        $region34: #{tpu_custom_call.1} parent=27 // pred_check_branch
          %290 = sbr.rel (%p288) target = $region36
        $region35: #{tpu_custom_call.1} parent=27 // pred_region
          %s291 = sand.u32 %s26, 1
          %s292 = scalar_lea.sflag [#allocation6], %s291
          %s293 = sand.u32 %s76, 1
          %s294 = smul.addr %s293, 8
          %s295 = scalar_lea.vmem [#allocation5], %s294
          %s297 = ssub.s32 128, 128
          %298 = vsyncadd %s292, %s297
          %s299 = smul.addr %s33, 128
          %s300 = scalar_lea.hbm %s1, %s299
          %s302 = sshll.u32 %s295, 4
          %s303 = int_to_ptr.vmem [resolvable:$true] %s302
          %305 = dma.hbm_to_vmem [thread:$0]  %s300, 128, %s303, %s292
        $region36: #{tpu_custom_call.1} parent=27 // pred_fallthru
          _
      $region28: #{tpu_custom_call.1} parent=5 // pred_fallthru
        _
      %p306 = scmp.le.s32.totalorder 1, %s26
      %p307 = scmp.lt.s32.totalorder %s26, 3
      %p308 = pnand %p306, %p307
      %p309 = pneg %p308
      // Predicated region
      $region37: #{tpu_custom_call.1} parent=5 // pred_check
        _
      $region38: #{tpu_custom_call.1} parent=5 // pred_check_branch
        %311 = sbr.rel (%p308) target = $region40
      $region39: #{tpu_custom_call.1} parent=5 // pred_region
        %s312 = ssub.s32 %s26, 1
        %s313 = sand.u32 %s53, 1
        %s314 = scalar_lea.sflag [#allocation3], %s313
        %s315 = sand.u32 %s53, 1
        %s316 = smul.addr %s315, 8
        %s317 = scalar_lea.vmem [#allocation2], %s316
        // Predicated region
        $region41: #{tpu_custom_call.1} parent=39 // pred_check
          %p318 = pneg %p66
        $region42: #{tpu_custom_call.1} parent=39 // pred_check_branch
          %320 = sbr.rel (%p318) target = $region44
        $region43: #{tpu_custom_call.1} parent=39 // pred_region
          %321 = dma.done %s314, 128
        $region44: #{tpu_custom_call.1} parent=39 // pred_fallthru
          _
        %s322 = sand.u32 %s31, 1
        %s323 = scalar_lea.sflag [#allocation6], %s322
        %s324 = sand.u32 %s79, 1
        %s325 = smul.addr %s324, 8
        %s326 = scalar_lea.vmem [#allocation5], %s325
        // Predicated region
        $region45: #{tpu_custom_call.1} parent=39 // pred_check
          %p327 = pneg %p92
        $region46: #{tpu_custom_call.1} parent=39 // pred_check_branch
          %329 = sbr.rel (%p327) target = $region48
        $region47: #{tpu_custom_call.1} parent=39 // pred_region
          %330 = dma.done %s323, 128
        $region48: #{tpu_custom_call.1} parent=39 // pred_fallthru
          _
        // Predicated region
        $region49: #{tpu_custom_call.1} parent=39 // pred_check
          %p331 = pneg %p113
        $region50: #{tpu_custom_call.1} parent=39 // pred_check_branch
          %333 = sbr.rel (%p331) target = $region52
        $region51: #{tpu_custom_call.1} parent=39 // pred_region
          %334 = dma.done [#allocation6], 512
        $region52: #{tpu_custom_call.1} parent=39 // pred_fallthru
          _
        // Predicated region
        $region53: #{tpu_custom_call.1} parent=39 // pred_check
          %p335 = pneg %p134
        $region54: #{tpu_custom_call.1} parent=39 // pred_check_branch
          %337 = sbr.rel (%p335) target = $region56
        $region55: #{tpu_custom_call.1} parent=39 // pred_region
          %338 = dma.done [#allocation9], 512
        $region56: #{tpu_custom_call.1} parent=39 // pred_fallthru
          _
        // Predicated region
        $region57: #{tpu_custom_call.1} parent=39 // pred_check
          %p339 = pneg %p155
        $region58: #{tpu_custom_call.1} parent=39 // pred_check_branch
          %341 = sbr.rel (%p339) target = $region60
        $region59: #{tpu_custom_call.1} parent=39 // pred_region
          %342 = dma.done [#allocation9], 512
        $region60: #{tpu_custom_call.1} parent=39 // pred_fallthru
          _
        %s343 = sand.u32 %s53, 1
        %s344 = scalar_lea.sflag [#allocation3], %s343
        %s345 = sand.u32 %s53, 1
        %s346 = smul.addr %s345, 8
        %s347 = scalar_lea.vmem [#allocation2], %s346
        %p348 = pneg %p66
        %p349 = pneg %p63
        %s350 = sand.u32 %s31, 1
        %s351 = scalar_lea.sflag [#allocation6], %s350
        %s352 = sand.u32 %s79, 1
        %s353 = smul.addr %s352, 8
        %s354 = scalar_lea.vmem [#allocation5], %s353
        %p355 = pneg %p92
        %p356 = pneg %p89
        %p357 = pneg %p113
        %p358 = pneg %p110
        %p359 = pneg %p134
        %p360 = pneg %p131
        %p361 = pneg %p155
        %p362 = pneg %p152
        %p363 = pneg %p183
        %p364 = pneg %p180
        %s365 = sand.u32 %s170, 1
        %s366 = scalar_lea.sflag [#allocation4], %s365
        %s367 = sand.u32 %s170, 1
        %s368 = smul.addr %s367, 8
        %s369 = scalar_lea.vmem [#allocation11], %s368
        %p370 = pneg %p211
        %p371 = pneg %p208
        %s372 = sand.u32 %s198, 1
        %s373 = scalar_lea.sflag [#allocation13], %s372
        %s374 = sand.u32 %s198, 1
        %s375 = smul.addr %s374, 8
        %s376 = scalar_lea.vmem [#allocation12], %s375
        %v377 = vld [vmem:[%s317] sm:$0xff]
        %v378 = vld [vmem:[%s326] sm:$0xff]
        %v379 = vld [vmem:[#allocation7] sm:$0xff]
        %v380 = vld [vmem:[#allocation7 + $0x8] sm:$0xff]
        %v381 = vld [vmem:[#allocation7 + $0x10] sm:$0xff]
        %v382 = vld [vmem:[#allocation7 + $0x18] sm:$0xff]
        %vm383 = vcmask 261120
        %v385 = vsel %vm383, %v377, 0
        %387 = vmatprep.subr.mxu0 0.0
        %388 = vmatpush1.msra.mxu0 %v379
        %389 = vmatprep.subr.mxu0 0.0
        %390 = vmatpush1.msra.mxu0 %v380
        %391 = vmatprep.subr.mxu0 0.0
        %392 = vmatpush1.msra.mxu0 %v381
        %393 = vmatprep.subr.mxu0 0.0
        %394 = vmatpush1.msra.mxu0 %v382
        %395 = vmatprep.subr.mxu0 0.0
        %396 = vmatpush1.msra.mxu0 0.0
        %397 = vmatprep.subr.mxu0 0.0
        %398 = vmatpush1.msra.mxu0 0.0
        %399 = vmatprep.subr.mxu0 0.0
        %400 = vmatpush1.msra.mxu0 0.0
        %401 = vmatprep.subr.mxu0 0.0
        %402 = vmatpush1.msra.mxu0 0.0
        %403 = vmatprep.subr.mxu0 0.0
        %404 = vmatpush1.msra.mxu0 0.0
        %405 = vmatprep.subr.mxu0 0.0
        %406 = vmatpush1.msra.mxu0 0.0
        %407 = vmatprep.subr.mxu0 0.0
        %408 = vmatpush1.msra.mxu0 0.0
        %409 = vmatprep.subr.mxu0 0.0
        %410 = vmatpush1.msra.mxu0 0.0
        %411 = vmatprep.subr.mxu0 0.0
        %412 = vmatpush1.msra.mxu0 0.0
        %413 = vmatprep.subr.mxu0 0.0
        %414 = vmatpush1.msra.mxu0 0.0
        %415 = vmatprep.subr.mxu0 0.0
        %416 = vmatpush1.msra.mxu0 0.0
        %417 = vmatprep.subr.mxu0 0.0
        %418 = vmatpush1.msra.mxu0 0.0
        %419 = vmatprep.subr.mxu0 0.0
        %420 = vmatpush1.msra.mxu0 0.0
        %421 = vmatprep.subr.mxu0 0.0
        %422 = vmatpush1.msra.mxu0 0.0
        %423 = vmatprep.subr.mxu0 0.0
        %424 = vmatpush1.msra.mxu0 0.0
        %425 = vmatprep.subr.mxu0 0.0
        %426 = vmatpush1.msra.mxu0 0.0
        %427 = vmatprep.subr.mxu0 0.0
        %428 = vmatpush1.msra.mxu0 0.0
        %429 = vmatprep.subr.mxu0 0.0
        %430 = vmatpush1.msra.mxu0 0.0
        %431 = vmatprep.subr.mxu0 0.0
        %432 = vmatpush1.msra.mxu0 0.0
        %433 = vmatprep.subr.mxu0 0.0
        %434 = vmatpush1.msra.mxu0 0.0
        %435 = vmatprep.subr.mxu0 0.0
        %436 = vmatpush1.msra.mxu0 0.0
        %437 = vmatprep.subr.mxu0 0.0
        %438 = vmatpush1.msra.mxu0 0.0
        %439 = vmatprep.subr.mxu0 0.0
        %440 = vmatpush1.msra.mxu0 0.0
        %441 = vmatprep.subr.mxu0 0.0
        %442 = vmatpush1.msra.mxu0 0.0
        %443 = vmatprep.subr.mxu0 0.0
        %444 = vmatpush1.msra.mxu0 0.0
        %445 = vmatprep.subr.mxu0 0.0
        %446 = vmatpush1.msra.mxu0 0.0
        %447 = vmatprep.subr.mxu0 0.0
        %448 = vmatpush1.msra.mxu0 0.0
        %449 = vmatprep.subr.mxu0 0.0
        %450 = vmatpush1.msra.mxu0 0.0
        %451 = vmatprep.mubr.f32.mxu0 0.0
        %452 = vmatmul.mubr.f32.gmra.mrb[0].mxu0 %v385
        %v453 = vpop.f32.mrb[0].mxu0
        %v454 = vadd.f32 0.0, %v453
        %v455 = vpop.f32.mrb[0].mxu0
        %456 = vdwg.mxu0
        %v458 = vsel %vm383, %v454, 0
        %v461 = vsel %vm383, %v378, 0
        %463 = vmatprep.subr.mxu0 0.0
        %464 = vmatpush1.xpose.msra.mxu0 %v461
        %465 = vmatprep.subr.mxu0 0.0
        %466 = vmatpush1.xpose.msra.mxu0 0.0
        %467 = vmatprep.subr.mxu0 0.0
        %468 = vmatpush1.xpose.msra.mxu0 0.0
        %469 = vmatprep.subr.mxu0 0.0
        %470 = vmatpush1.xpose.msra.mxu0 0.0
        %471 = vmatprep.subr.mxu0 0.0
        %472 = vmatpush1.xpose.msra.mxu0 0.0
        %473 = vmatprep.subr.mxu0 0.0
        %474 = vmatpush1.xpose.msra.mxu0 0.0
        %475 = vmatprep.subr.mxu0 0.0
        %476 = vmatpush1.xpose.msra.mxu0 0.0
        %477 = vmatprep.subr.mxu0 0.0
        %478 = vmatpush1.xpose.msra.mxu0 0.0
        %479 = vmatprep.subr.mxu0 0.0
        %480 = vmatpush1.xpose.msra.mxu0 0.0
        %481 = vmatprep.subr.mxu0 0.0
        %482 = vmatpush1.xpose.msra.mxu0 0.0
        %483 = vmatprep.subr.mxu0 0.0
        %484 = vmatpush1.xpose.msra.mxu0 0.0
        %485 = vmatprep.subr.mxu0 0.0
        %486 = vmatpush1.xpose.msra.mxu0 0.0
        %487 = vmatprep.subr.mxu0 0.0
        %488 = vmatpush1.xpose.msra.mxu0 0.0
        %489 = vmatprep.subr.mxu0 0.0
        %490 = vmatpush1.xpose.msra.mxu0 0.0
        %491 = vmatprep.subr.mxu0 0.0
        %492 = vmatpush1.xpose.msra.mxu0 0.0
        %493 = vmatprep.subr.mxu0 0.0
        %494 = vmatpush1.xpose.msra.mxu0 0.0
        %495 = vmatprep.subr.mxu0 0.0
        %496 = vmatpush1.xpose.msra.mxu0 0.0
        %497 = vmatprep.subr.mxu0 0.0
        %498 = vmatpush1.xpose.msra.mxu0 0.0
        %499 = vmatprep.subr.mxu0 0.0
        %500 = vmatpush1.xpose.msra.mxu0 0.0
        %501 = vmatprep.subr.mxu0 0.0
        %502 = vmatpush1.xpose.msra.mxu0 0.0
        %503 = vmatprep.subr.mxu0 0.0
        %504 = vmatpush1.xpose.msra.mxu0 0.0
        %505 = vmatprep.subr.mxu0 0.0
        %506 = vmatpush1.xpose.msra.mxu0 0.0
        %507 = vmatprep.subr.mxu0 0.0
        %508 = vmatpush1.xpose.msra.mxu0 0.0
        %509 = vmatprep.subr.mxu0 0.0
        %510 = vmatpush1.xpose.msra.mxu0 0.0
        %511 = vmatprep.subr.mxu0 0.0
        %512 = vmatpush1.xpose.msra.mxu0 0.0
        %513 = vmatprep.subr.mxu0 0.0
        %514 = vmatpush1.xpose.msra.mxu0 0.0
        %515 = vmatprep.subr.mxu0 0.0
        %516 = vmatpush1.xpose.msra.mxu0 0.0
        %517 = vmatprep.subr.mxu0 0.0
        %518 = vmatpush1.xpose.msra.mxu0 0.0
        %519 = vmatprep.subr.mxu0 0.0
        %520 = vmatpush1.xpose.msra.mxu0 0.0
        %521 = vmatprep.subr.mxu0 0.0
        %522 = vmatpush1.xpose.msra.mxu0 0.0
        %523 = vmatprep.subr.mxu0 0.0
        %524 = vmatpush1.xpose.msra.mxu0 0.0
        %525 = vmatprep.subr.mxu0 0.0
        %526 = vmatpush1.xpose.msra.mxu0 0.0
        %527 = vmatprep.mubr.f32.mxu0 0.0
        %528 = vmatmul.mubr.f32.gmra.mrb[0].mxu0 %v458
        %v529 = vpop.f32.mrb[0].mxu0
        %v530 = vadd.f32 0.0, %v529
        %v531 = vpop.f32.mrb[0].mxu0
        %532 = vdwg.mxu0
        %vm533 = vcmask 64512
        %v534 = vsel %vm533, %v530, -inf
        %535 = vmax.xlane.f32.xlu0 %v534
        %v536 = vpop.xlane.xlu0 %535
        %v537 = vsub.f32 %v530, %v536
        %v538 = vmul.f32 %v537, 1.442695
        %v539 = vpow.pop %v538
        %v540 = vsel %vm533, %v539, 0.0
        %541 = vadd.xlane.f32.xlu0 %v540
        %v542 = vpop.xlane.xlu0 %541
        %v543 = vrcp.pop %v542
        %v544 = vmul.f32 %v539, %v543
        %v546 = vsel %vm533, %v544, 0
        %548 = vmatprep.subr.mxu0 0.0
        %549 = vmatpush1.msra.mxu0 %v378
        %550 = vmatprep.subr.mxu0 0.0
        %551 = vmatpush1.msra.mxu0 0.0
        %552 = vmatprep.subr.mxu0 0.0
        %553 = vmatpush1.msra.mxu0 0.0
        %554 = vmatprep.subr.mxu0 0.0
        %555 = vmatpush1.msra.mxu0 0.0
        %556 = vmatprep.subr.mxu0 0.0
        %557 = vmatpush1.msra.mxu0 0.0
        %558 = vmatprep.subr.mxu0 0.0
        %559 = vmatpush1.msra.mxu0 0.0
        %560 = vmatprep.subr.mxu0 0.0
        %561 = vmatpush1.msra.mxu0 0.0
        %562 = vmatprep.subr.mxu0 0.0
        %563 = vmatpush1.msra.mxu0 0.0
        %564 = vmatprep.subr.mxu0 0.0
        %565 = vmatpush1.msra.mxu0 0.0
        %566 = vmatprep.subr.mxu0 0.0
        %567 = vmatpush1.msra.mxu0 0.0
        %568 = vmatprep.subr.mxu0 0.0
        %569 = vmatpush1.msra.mxu0 0.0
        %570 = vmatprep.subr.mxu0 0.0
        %571 = vmatpush1.msra.mxu0 0.0
        %572 = vmatprep.subr.mxu0 0.0
        %573 = vmatpush1.msra.mxu0 0.0
        %574 = vmatprep.subr.mxu0 0.0
        %575 = vmatpush1.msra.mxu0 0.0
        %576 = vmatprep.subr.mxu0 0.0
        %577 = vmatpush1.msra.mxu0 0.0
        %578 = vmatprep.subr.mxu0 0.0
        %579 = vmatpush1.msra.mxu0 0.0
        %580 = vmatprep.subr.mxu0 0.0
        %581 = vmatpush1.msra.mxu0 0.0
        %582 = vmatprep.subr.mxu0 0.0
        %583 = vmatpush1.msra.mxu0 0.0
        %584 = vmatprep.subr.mxu0 0.0
        %585 = vmatpush1.msra.mxu0 0.0
        %586 = vmatprep.subr.mxu0 0.0
        %587 = vmatpush1.msra.mxu0 0.0
        %588 = vmatprep.subr.mxu0 0.0
        %589 = vmatpush1.msra.mxu0 0.0
        %590 = vmatprep.subr.mxu0 0.0
        %591 = vmatpush1.msra.mxu0 0.0
        %592 = vmatprep.subr.mxu0 0.0
        %593 = vmatpush1.msra.mxu0 0.0
        %594 = vmatprep.subr.mxu0 0.0
        %595 = vmatpush1.msra.mxu0 0.0
        %596 = vmatprep.subr.mxu0 0.0
        %597 = vmatpush1.msra.mxu0 0.0
        %598 = vmatprep.subr.mxu0 0.0
        %599 = vmatpush1.msra.mxu0 0.0
        %600 = vmatprep.subr.mxu0 0.0
        %601 = vmatpush1.msra.mxu0 0.0
        %602 = vmatprep.subr.mxu0 0.0
        %603 = vmatpush1.msra.mxu0 0.0
        %604 = vmatprep.subr.mxu0 0.0
        %605 = vmatpush1.msra.mxu0 0.0
        %606 = vmatprep.subr.mxu0 0.0
        %607 = vmatpush1.msra.mxu0 0.0
        %608 = vmatprep.subr.mxu0 0.0
        %609 = vmatpush1.msra.mxu0 0.0
        %610 = vmatprep.subr.mxu0 0.0
        %611 = vmatpush1.msra.mxu0 0.0
        %612 = vmatprep.mubr.f32.mxu0 0.0
        %613 = vmatmul.mubr.f32.gmra.mrb[0].mxu0 %v546
        %v614 = vpop.f32.mrb[0].mxu0
        %v615 = vadd.f32 0.0, %v614
        %v616 = vpop.f32.mrb[0].mxu0
        %617 = vdwg.mxu0
        %v618 = vld [vmem:[#allocation8] sm:$0xff]
        %v619 = vld [vmem:[#allocation8 + $0x8] sm:$0xff]
        %v620 = vld [vmem:[#allocation8 + $0x10] sm:$0xff]
        %v621 = vld [vmem:[#allocation8 + $0x18] sm:$0xff]
        %v622 = vld [vmem:[#allocation10] sm:$0xff]
        %v623 = vld [vmem:[#allocation10 + $0x8] sm:$0xff]
        %v624 = vld [vmem:[#allocation10 + $0x10] sm:$0xff]
        %v625 = vld [vmem:[#allocation10 + $0x18] sm:$0xff]
        %626 = vmatprep.subr.mxu0 0.0
        %627 = vmatpush1.msra.mxu0 %v622
        %628 = vmatprep.subr.mxu0 0.0
        %629 = vmatpush1.msra.mxu0 %v623
        %630 = vmatprep.subr.mxu0 0.0
        %631 = vmatpush1.msra.mxu0 %v624
        %632 = vmatprep.subr.mxu0 0.0
        %633 = vmatpush1.msra.mxu0 %v625
        %634 = vmatprep.subr.mxu0 0.0
        %635 = vmatpush1.msra.mxu0 0.0
        %636 = vmatprep.subr.mxu0 0.0
        %637 = vmatpush1.msra.mxu0 0.0
        %638 = vmatprep.subr.mxu0 0.0
        %639 = vmatpush1.msra.mxu0 0.0
        %640 = vmatprep.subr.mxu0 0.0
        %641 = vmatpush1.msra.mxu0 0.0
        %642 = vmatprep.subr.mxu0 0.0
        %643 = vmatpush1.msra.mxu0 0.0
        %644 = vmatprep.subr.mxu0 0.0
        %645 = vmatpush1.msra.mxu0 0.0
        %646 = vmatprep.subr.mxu0 0.0
        %647 = vmatpush1.msra.mxu0 0.0
        %648 = vmatprep.subr.mxu0 0.0
        %649 = vmatpush1.msra.mxu0 0.0
        %650 = vmatprep.subr.mxu0 0.0
        %651 = vmatpush1.msra.mxu0 0.0
        %652 = vmatprep.subr.mxu0 0.0
        %653 = vmatpush1.msra.mxu0 0.0
        %654 = vmatprep.subr.mxu0 0.0
        %655 = vmatpush1.msra.mxu0 0.0
        %656 = vmatprep.subr.mxu0 0.0
        %657 = vmatpush1.msra.mxu0 0.0
        %658 = vmatprep.subr.mxu0 0.0
        %659 = vmatpush1.msra.mxu0 0.0
        %660 = vmatprep.subr.mxu0 0.0
        %661 = vmatpush1.msra.mxu0 0.0
        %662 = vmatprep.subr.mxu0 0.0
        %663 = vmatpush1.msra.mxu0 0.0
        %664 = vmatprep.subr.mxu0 0.0
        %665 = vmatpush1.msra.mxu0 0.0
        %666 = vmatprep.subr.mxu0 0.0
        %667 = vmatpush1.msra.mxu0 0.0
        %668 = vmatprep.subr.mxu0 0.0
        %669 = vmatpush1.msra.mxu0 0.0
        %670 = vmatprep.subr.mxu0 0.0
        %671 = vmatpush1.msra.mxu0 0.0
        %672 = vmatprep.subr.mxu0 0.0
        %673 = vmatpush1.msra.mxu0 0.0
        %674 = vmatprep.subr.mxu0 0.0
        %675 = vmatpush1.msra.mxu0 0.0
        %676 = vmatprep.subr.mxu0 0.0
        %677 = vmatpush1.msra.mxu0 0.0
        %678 = vmatprep.subr.mxu0 0.0
        %679 = vmatpush1.msra.mxu0 0.0
        %680 = vmatprep.subr.mxu0 0.0
        %681 = vmatpush1.msra.mxu0 0.0
        %682 = vmatprep.subr.mxu0 0.0
        %683 = vmatpush1.msra.mxu0 0.0
        %684 = vmatprep.subr.mxu0 0.0
        %685 = vmatpush1.msra.mxu0 0.0
        %686 = vmatprep.subr.mxu0 0.0
        %687 = vmatpush1.msra.mxu0 0.0
        %688 = vmatprep.subr.mxu0 0.0
        %689 = vmatpush1.msra.mxu0 0.0
        %690 = vmatprep.mubr.f32.mxu0 0.0
        %691 = vmatmul.mubr.f32.gmra.mrb[0].mxu0 %v458
        %v692 = vpop.f32.mrb[0].mxu0
        %v693 = vadd.f32 0.0, %v692
        %v694 = vpop.f32.mrb[0].mxu0
        %695 = vdwg.mxu0
        %v697 = vsel %vm383, %v615, 0
        %699 = vmatprep.subr.mxu0 0.0
        %700 = vmatpush1.msra.mxu0 %v618
        %701 = vmatprep.subr.mxu0 0.0
        %702 = vmatpush1.msra.mxu0 %v619
        %703 = vmatprep.subr.mxu0 0.0
        %704 = vmatpush1.msra.mxu0 %v620
        %705 = vmatprep.subr.mxu0 0.0
        %706 = vmatpush1.msra.mxu0 %v621
        %707 = vmatprep.subr.mxu0 0.0
        %708 = vmatpush1.msra.mxu0 0.0
        %709 = vmatprep.subr.mxu0 0.0
        %710 = vmatpush1.msra.mxu0 0.0
        %711 = vmatprep.subr.mxu0 0.0
        %712 = vmatpush1.msra.mxu0 0.0
        %713 = vmatprep.subr.mxu0 0.0
        %714 = vmatpush1.msra.mxu0 0.0
        %715 = vmatprep.subr.mxu0 0.0
        %716 = vmatpush1.msra.mxu0 0.0
        %717 = vmatprep.subr.mxu0 0.0
        %718 = vmatpush1.msra.mxu0 0.0
        %719 = vmatprep.subr.mxu0 0.0
        %720 = vmatpush1.msra.mxu0 0.0
        %721 = vmatprep.subr.mxu0 0.0
        %722 = vmatpush1.msra.mxu0 0.0
        %723 = vmatprep.subr.mxu0 0.0
        %724 = vmatpush1.msra.mxu0 0.0
        %725 = vmatprep.subr.mxu0 0.0
        %726 = vmatpush1.msra.mxu0 0.0
        %727 = vmatprep.subr.mxu0 0.0
        %728 = vmatpush1.msra.mxu0 0.0
        %729 = vmatprep.subr.mxu0 0.0
        %730 = vmatpush1.msra.mxu0 0.0
        %731 = vmatprep.subr.mxu0 0.0
        %732 = vmatpush1.msra.mxu0 0.0
        %733 = vmatprep.subr.mxu0 0.0
        %734 = vmatpush1.msra.mxu0 0.0
        %735 = vmatprep.subr.mxu0 0.0
        %736 = vmatpush1.msra.mxu0 0.0
        %737 = vmatprep.subr.mxu0 0.0
        %738 = vmatpush1.msra.mxu0 0.0
        %739 = vmatprep.subr.mxu0 0.0
        %740 = vmatpush1.msra.mxu0 0.0
        %741 = vmatprep.subr.mxu0 0.0
        %742 = vmatpush1.msra.mxu0 0.0
        %743 = vmatprep.subr.mxu0 0.0
        %744 = vmatpush1.msra.mxu0 0.0
        %745 = vmatprep.subr.mxu0 0.0
        %746 = vmatpush1.msra.mxu0 0.0
        %747 = vmatprep.subr.mxu0 0.0
        %748 = vmatpush1.msra.mxu0 0.0
        %749 = vmatprep.subr.mxu0 0.0
        %750 = vmatpush1.msra.mxu0 0.0
        %751 = vmatprep.subr.mxu0 0.0
        %752 = vmatpush1.msra.mxu0 0.0
        %753 = vmatprep.subr.mxu0 0.0
        %754 = vmatpush1.msra.mxu0 0.0
        %755 = vmatprep.subr.mxu0 0.0
        %756 = vmatpush1.msra.mxu0 0.0
        %757 = vmatprep.subr.mxu0 0.0
        %758 = vmatpush1.msra.mxu0 0.0
        %759 = vmatprep.subr.mxu0 0.0
        %760 = vmatpush1.msra.mxu0 0.0
        %761 = vmatprep.subr.mxu0 0.0
        %762 = vmatpush1.msra.mxu0 0.0
        %763 = vmatprep.mubr.f32.mxu0 0.0
        %764 = vmatmul.mubr.f32.gmra.mrb[0].mxu0 %v697
        %v765 = vpop.f32.mrb[0].mxu0
        %v766 = vadd.f32 %v693, %v765
        %v767 = vpop.f32.mrb[0].mxu0
        %768 = vdwg.mxu0
        %v769 = vtanh.pop %v766
        %770 = vst.msk [vmem:[%s369] sm:$0xff] %vm383, %v769
        %771 = vst.msk [vmem:[%s376] sm:$0xff] %vm533, %v544
        %s772 = sand.u32 %s170, 1
        %s773 = scalar_lea.sflag [#allocation4], %s772
        %s774 = sand.u32 %s170, 1
        %s775 = smul.addr %s774, 8
        %s776 = scalar_lea.vmem [#allocation11], %s775
        %s777 = sand.u32 %s198, 1
        %s778 = scalar_lea.sflag [#allocation13], %s777
        %s779 = sand.u32 %s198, 1
        %s780 = smul.addr %s779, 8
        %s781 = scalar_lea.vmem [#allocation12], %s780
        // Predicated region
        $region61: #{tpu_custom_call.1} parent=39 // pred_check
          %p782 = pneg %p180
        $region62: #{tpu_custom_call.1} parent=39 // pred_check_branch
          %784 = sbr.rel (%p782) target = $region64
        $region63: #{tpu_custom_call.1} parent=39 // pred_region
          %s786 = ssub.s32 128, 128
          %787 = vsyncadd %s773, %s786
          %s788 = sadd.s32 %s36, %s35
          %s789 = smul.addr %s788, 128
          %s790 = scalar_lea.hbm %s5, %s789
          %s792 = sshll.u32 %s776, 4
          %s793 = int_to_ptr.vmem [resolvable:$true] %s792
          %795 = dma.vmem_to_hbm [thread:$0]  %s793, 128, %s790, %s773
        $region64: #{tpu_custom_call.1} parent=39 // pred_fallthru
          _
        // Predicated region
        $region65: #{tpu_custom_call.1} parent=39 // pred_check
          %p796 = pneg %p208
        $region66: #{tpu_custom_call.1} parent=39 // pred_check_branch
          %798 = sbr.rel (%p796) target = $region68
        $region67: #{tpu_custom_call.1} parent=39 // pred_region
          %s800 = ssub.s32 128, 128
          %801 = vsyncadd %s778, %s800
          %s802 = sadd.s32 %s36, %s35
          %s803 = smul.addr %s802, 128
          %s804 = scalar_lea.hbm %s6, %s803
          %s806 = sshll.u32 %s781, 4
          %s807 = int_to_ptr.vmem [resolvable:$true] %s806
          %809 = dma.vmem_to_hbm [thread:$0]  %s807, 128, %s804, %s778
        $region68: #{tpu_custom_call.1} parent=39 // pred_fallthru
          _
      $region40: #{tpu_custom_call.1} parent=5 // pred_fallthru
        _
      %p810 = scmp.le.s32.totalorder 2, %s26
      // Predicated region
      $region69: #{tpu_custom_call.1} parent=5 // pred_check
        %p811 = pneg %p810
      $region70: #{tpu_custom_call.1} parent=5 // pred_check_branch
        %813 = sbr.rel (%p811) target = $region72
      $region71: #{tpu_custom_call.1} parent=5 // pred_region
        %s814 = ssub.s32 %s26, 2
        // Predicated region
        $region73: #{tpu_custom_call.1} parent=71 // pred_check
          %p815 = pneg %p186
        $region74: #{tpu_custom_call.1} parent=71 // pred_check_branch
          %817 = sbr.rel (%p815) target = $region76
        $region75: #{tpu_custom_call.1} parent=71 // pred_region
          %s818 = sand.u32 %s171, 1
          %s819 = scalar_lea.sflag [#allocation4], %s818
          %s820 = sand.u32 %s171, 1
          %s821 = smul.addr %s820, 8
          %s822 = scalar_lea.vmem [#allocation11], %s821
          %823 = dma.done %s819, 128
        $region76: #{tpu_custom_call.1} parent=71 // pred_fallthru
          _
        // Predicated region
        $region77: #{tpu_custom_call.1} parent=71 // pred_check
          %p824 = pneg %p214
        $region78: #{tpu_custom_call.1} parent=71 // pred_check_branch
          %826 = sbr.rel (%p824) target = $region80
        $region79: #{tpu_custom_call.1} parent=71 // pred_region
          %s827 = sand.u32 %s199, 1
          %s828 = scalar_lea.sflag [#allocation13], %s827
          %s829 = sand.u32 %s199, 1
          %s830 = smul.addr %s829, 8
          %s831 = scalar_lea.vmem [#allocation12], %s830
          %832 = dma.done %s828, 128
        $region80: #{tpu_custom_call.1} parent=71 // pred_fallthru
          _
      $region72: #{tpu_custom_call.1} parent=5 // pred_fallthru
        _
    $region6: #{tpu_custom_call.1} parent=1 // loop_footer
      %s30 = sadd.s32 1, %s26
    $region7: #{tpu_custom_call.1} parent=1 // loop_footer_branch
      %25 = sbr.rel target = $region3
    $region8: #{tpu_custom_call.1} parent=1 // loop_exit
      _
    %833 = vsyncpa [#allocation3], 1
    %s834 = scalar_lea.sflag [#allocation3], 1
    %835 = vsyncpa %s834, 1
    %836 = vsyncpa [#allocation6], 1
    %s837 = scalar_lea.sflag [#allocation6], 1
    %838 = vsyncpa %s837, 1
    %839 = vsyncpa [#allocation9], 1
    %840 = vsyncpa [#allocation4], 1
    %s841 = scalar_lea.sflag [#allocation4], 1
    %842 = vsyncpa %s841, 1
    %843 = vsyncpa [#allocation13], 1
    %s844 = scalar_lea.sflag [#allocation13], 1
    %845 = vsyncpa %s844, 1

</llo_original>
